<compile_context>
chip_gen: v7x
topology: tpu7x:2x2x1
jax: 0.10.0
libtpu: 0.0.40
codegen_flags: <defaults>
</compile_context>

<pallas_src>
import jax
import jax.numpy as jnp
from jax.experimental import pallas as pl
from jax.experimental.pallas import tpu as pltpu


def _round_up(n, m):
    return ((n + m - 1) // m) * m


def resblock_kernel(x_ref, w1_ref, b1_ref, w2_ref, b2_ref, o_ref, h_ref):
    """Grid (i, j): i tiles the batch, j tiles the output columns of dim."""
    j = pl.program_id(1)
    tn = o_ref.shape[1]

    # First linear + ReLU only once per batch tile (j == 0); result is carried in
    # the VMEM scratch across the j (output-column) axis.
    @pl.when(j == 0)
    def _():
        h = jnp.dot(x_ref[...].astype(w1_ref.dtype), w1_ref[...],
                    preferred_element_type=jnp.float32)          # MXU, f32 acc
        h_ref[...] = jnp.maximum(h + b1_ref[...], 0.0)           # bias+ReLU on VPU (f32)

    # Residual slice of x for this column tile (static full-width view when the
    # whole dim fits in one tile; aligned dynamic slice otherwise).
    if tn == x_ref.shape[1]:
        x_res = x_ref[...]
    else:
        col = pl.multiple_of(j * tn, 128)
        x_res = x_ref[:, pl.ds(col, tn)]
    x_res = x_res.astype(jnp.float32)

    y = jnp.dot(h_ref[...].astype(w2_ref.dtype), w2_ref[...],
                preferred_element_type=jnp.float32)              # MXU, f32 acc
    o_ref[...] = (y + b2_ref[...] + x_res).astype(o_ref.dtype)   # bias + residual (f32)


def _vmem_capacity_bytes():
    try:
        return int(pltpu.get_tpu_info().vmem_capacity_bytes)
    except Exception:
        return 64 << 20  # conservative fallback: v7x-sized VMEM


def _vmem_usage(tn, dim_p, hidden_p, x_itemsize, w_itemsize):
    # Constant-index weight/bias blocks are DMA'd once but still double-buffered.
    fixed = 2 * (dim_p * hidden_p * w_itemsize          # W1
                 + hidden_p * tn * w_itemsize           # W2 column tile
                 + (hidden_p + tn) * 4)                 # b1 + b2 (f32)
    # Per batch row: double-buffered x and out tiles, f32 h scratch, f32 temporaries.
    per_row = (2 * dim_p * x_itemsize + 2 * tn * x_itemsize
               + hidden_p * 4 + 2 * tn * 4)
    return fixed, per_row


def _choose_tiles(B, dim_p, hidden_p, x_itemsize, w_itemsize, vmem_budget, block_m=None):
    """Pick (bm, tn): batch-tile rows and output-column tile width (both static)."""
    bm_cap = (B // 8) * 8 if B >= 8 else B              # never exceed the array
    # Aim for >= ~2 MiB x tiles to amortize per-grid-step overhead (~0.35 us).
    bm_target = _round_up(max(512, (2 << 20) // (dim_p * x_itemsize)), 8)
    if block_m is not None:
        bm_target = max(8, _round_up(block_m, 8))
    n_groups = dim_p // 128
    fallback = None
    for k in range(1, n_groups + 1):                    # k = number of column tiles
        if n_groups % k:
            continue
        tn = dim_p // k
        fixed, per_row = _vmem_usage(tn, dim_p, hidden_p, x_itemsize, w_itemsize)
        avail = vmem_budget - fixed
        if avail < 8 * per_row:
            continue
        bm_max = (avail // per_row) // 8 * 8
        bm = max(1, min(bm_target, 4096, bm_max, bm_cap))
        if bm >= min(256, bm_cap):
            return bm, tn                               # fewest column tiles with a healthy bm
        if fallback is None or bm > fallback[0]:
            fallback = (bm, tn)
    if fallback is None:
        # TODO(synk): for absurdly large dim even an (8, dim_p) x tile overflows VMEM;
        # that would additionally need K-tiling of the first matmul.
        return max(1, min(8, bm_cap)), 128
    return fallback


def resblock_forward(x, w1, b1, w2, b2, *, dot_dtype=jnp.bfloat16, block_m=None):
    """y = relu(x @ w1 + b1) @ w2 + b2 + x.

    dot_dtype: MXU input dtype for the matmuls (accumulation is always f32).
      bf16 (default) keeps the kernel HBM-bound on all generations; pass None
      for a strict-f32 path (matches the PyTorch reference to ~1e-5).
    """
    B, dim = x.shape
    dim_w, hidden = w1.shape
    assert dim_w == dim and w2.shape == (hidden, dim)
    assert b1.size == hidden and b2.size == dim

    dim_p = _round_up(dim, 128)
    hidden_p = _round_up(hidden, 128)     # 64 -> 128; do NOT pad further (HBM-bound)

    w_dtype = jnp.dtype(dot_dtype) if dot_dtype is not None else jnp.dtype(w1.dtype)

    def pad2(a, rows, cols, dtype):
        a = a.astype(dtype)
        pr, pc = rows - a.shape[0], cols - a.shape[1]
        return jnp.pad(a, ((0, pr), (0, pc))) if (pr or pc) else a

    # Weights pre-cast (one-time) to the dot dtype; biases stay f32.
    w1_p = pad2(w1, dim_p, hidden_p, w_dtype)
    w2_p = pad2(w2, hidden_p, dim_p, w_dtype)
    b1_p = pad2(b1.reshape(1, hidden), 1, hidden_p, jnp.float32)
    b2_p = pad2(b2.reshape(1, dim), 1, dim_p, jnp.float32)
    # x: pad features only if dim is not lane-aligned; never pad the batch.
    x_p = pad2(x, B, dim_p, x.dtype)

    x_itemsize = jnp.dtype(x.dtype).itemsize
    w_itemsize = jnp.dtype(w_dtype).itemsize

    vmem_cap = _vmem_capacity_bytes()
    # ~100 MiB usable on 128 MiB chips (v5e/v6e); ~56 MiB on 64 MiB v7x.
    vmem_budget = max(min(vmem_cap - (8 << 20), 100 << 20), 24 << 20)

    bm, tn = _choose_tiles(B, dim_p, hidden_p, x_itemsize, w_itemsize,
                           vmem_budget, block_m=block_m)
    # Give the grid >= 2 batch steps when possible so v7x's 2 TensorCores both get
    # work and the DMA pipeline has something to overlap (negligible cost on 1-TC chips).
    if B >= 16 and pl.cdiv(B, bm) < 2:
        bm = max(8, _round_up(pl.cdiv(B, 2), 8))

    fixed, per_row = _vmem_usage(tn, dim_p, hidden_p, x_itemsize, w_itemsize)
    vmem_limit = int(min(max(fixed + bm * per_row + (6 << 20), 32 << 20), vmem_budget))

    grid = (pl.cdiv(B, bm), dim_p // tn)

    out_p = pl.pallas_call(
        resblock_kernel,
        out_shape=jax.ShapeDtypeStruct((B, dim_p), x.dtype),
        grid_spec=pltpu.PrefetchScalarGridSpec(
            num_scalar_prefetch=0,
            grid=grid,
            in_specs=[
                pl.BlockSpec((bm, dim_p), lambda i, j: (i, 0)),        # x (full width; re-fetched only when i changes)
                pl.BlockSpec((dim_p, hidden_p), lambda i, j: (0, 0)),  # W1 (resident)
                pl.BlockSpec((1, hidden_p), lambda i, j: (0, 0)),      # b1 (resident, f32)
                pl.BlockSpec((hidden_p, tn), lambda i, j: (0, j)),     # W2 column tile
                pl.BlockSpec((1, tn), lambda i, j: (0, j)),            # b2 column tile (f32)
            ],
            out_specs=pl.BlockSpec((bm, tn), lambda i, j: (i, j)),
            scratch_shapes=[pltpu.VMEM((bm, hidden_p), jnp.float32)],  # h = relu(xW1+b1), carried over j
        ),
        compiler_params=pltpu.CompilerParams(
            dimension_semantics=("parallel", "arbitrary"),
            vmem_limit_bytes=vmem_limit,
        ),
    )(x_p, w1_p, b1_p, w2_p, b2_p)

    # Slice off feature padding only when it was added (no copy in the aligned case).
    return out_p if dim_p == dim else out_p[:, :dim]


def init_params(key, dim, hidden=64, dtype=jnp.float32):
    """Deterministic init mimicking PyTorch nn.Linear default (uniform +/- 1/sqrt(fan_in))."""
    k1, k2, k3, k4 = jax.random.split(key, 4)
    bound1 = 1.0 / jnp.sqrt(dim)
    bound2 = 1.0 / jnp.sqrt(hidden)
    w1 = jax.random.uniform(k1, (dim, hidden), dtype, -bound1, bound1)
    b1 = jax.random.uniform(k2, (1, hidden), dtype, -bound1, bound1)
    w2 = jax.random.uniform(k3, (hidden, dim), dtype, -bound2, bound2)
    b2 = jax.random.uniform(k4, (1, dim), dtype, -bound2, bound2)
    return w1, b1, w2, b2


def resblock_ref(x, w1, b1, w2, b2):
    h = jnp.maximum(x @ w1 + b1, 0.0)
    return h @ w2 + b2 + x


if __name__ == "__main__":
    key = jax.random.PRNGKey(0)
    kx, kp = jax.random.split(key)

    batch, dim = 8, 32
    x = jax.random.normal(kx, (batch, dim), jnp.float32)
    w1, b1, w2, b2 = init_params(kp, dim)

    ref = resblock_ref(x, w1, b1, w2, b2)

    # Strict f32 path (bit-exact padding scheme, matches reference tightly).
    out_f32 = jax.block_until_ready(resblock_forward(x, w1, b1, w2, b2, dot_dtype=None))
    assert out_f32.shape == (batch, dim)
    assert jnp.allclose(out_f32, ref, atol=1e-5, rtol=1e-5), "f32 path mismatch vs reference"

    # Production default: bf16 MXU inputs with f32 accumulation (looser tolerance).
    out_bf16 = jax.block_until_ready(resblock_forward(x, w1, b1, w2, b2))
    assert out_bf16.shape == (batch, dim)
    assert jnp.allclose(out_bf16, ref, atol=5e-2, rtol=5e-2), "bf16 path mismatch vs reference"

    print("KERNEL_OK")
</pallas_src>

<mosaic_0001>
module attributes {stable_mosaic.version = 11 : i64} {
  func.func @resblock_kernel(%arg0: i32, %arg1: i32, %arg2: memref<8x128xf32, #tpu.memory_space<vmem>>, %arg3: memref<128x128xf32, #tpu.memory_space<vmem>>, %arg4: memref<1x128xf32, #tpu.memory_space<vmem>>, %arg5: memref<128x128xf32, #tpu.memory_space<vmem>>, %arg6: memref<1x128xf32, #tpu.memory_space<vmem>>, %arg7: memref<8x128xf32, #tpu.memory_space<vmem>>, %arg8: memref<8x128xf32, #tpu.memory_space<vmem>>) attributes {dimension_semantics = [#tpu.dimension_semantics<parallel>, #tpu.dimension_semantics<arbitrary>], iteration_bounds = array<i64: 1, 1>, scalar_prefetch = 0 : i64, scratch_operands = 1 : i64, tpu.core_type = #tpu.core_type<tc>, window_params = [{transform_indices = @transform_0, window_bounds = array<i64: 8, 128>}, {pipeline_mode = #tpu.pipeline_mode<synchronous>, transform_indices = @transform_1, window_bounds = array<i64: 128, 128>}, {pipeline_mode = #tpu.pipeline_mode<synchronous>, transform_indices = @transform_2, window_bounds = array<i64: 1, 128>}, {transform_indices = @transform_3, window_bounds = array<i64: 128, 128>}, {transform_indices = @transform_4, window_bounds = array<i64: 1, 128>}, {transform_indices = @transform_5, window_bounds = array<i64: 8, 128>}]} {
    %c0_i32 = arith.constant 0 : i32
    %0 = arith.cmpi eq, %arg1, %c0_i32 : i32
    %1 = arith.extui %0 : i1 to i32
    %c0_i32_0 = arith.constant 0 : i32
    %2 = arith.cmpi ne, %1, %c0_i32_0 : i32
    scf.if %2 {
      %c0_10 = arith.constant 0 : index
      %c0_11 = arith.constant 0 : index
      %12 = vector.load %arg2[%c0_10, %c0_11] : memref<8x128xf32, #tpu.memory_space<vmem>>, vector<8x128xf32>
      %c0_12 = arith.constant 0 : index
      %c0_13 = arith.constant 0 : index
      %13 = vector.load %arg3[%c0_12, %c0_13] : memref<128x128xf32, #tpu.memory_space<vmem>>, vector<128x128xf32>
      %cst_14 = arith.constant dense<0.000000e+00> : vector<8x128xf32>
      %14 = tpu.matmul %12, %13, %cst_14 {dimension_numbers = #tpu.dot_dimension_numbers<[1], [0], [0], [1], [0, 0, 1, 1], [], []>} : vector<8x128xf32>, vector<128x128xf32>, vector<8x128xf32> -> vector<8x128xf32>
      %c0_15 = arith.constant 0 : index
      %c0_16 = arith.constant 0 : index
      %15 = vector.load %arg4[%c0_15, %c0_16] : memref<1x128xf32, #tpu.memory_space<vmem>>, vector<1x128xf32>
      %16 = vector.broadcast %15 : vector<1x128xf32> to vector<8x128xf32>
      %17 = arith.addf %14, %16 : vector<8x128xf32>
      %cst_17 = arith.constant 0.000000e+00 : f32
      %18 = vector.broadcast %cst_17 : f32 to vector<8x128xf32>
      %19 = arith.maximumf %17, %18 : vector<8x128xf32>
      %c0_18 = arith.constant 0 : index
      %c0_19 = arith.constant 0 : index
      %20 = vector.load %arg8[%c0_18, %c0_19] : memref<8x128xf32, #tpu.memory_space<vmem>>, vector<8x128xf32>
      tpu.vector_store %arg8[%c0_18, %c0_19], %19 {strides = array<i32>} : memref<8x128xf32, #tpu.memory_space<vmem>>, vector<8x128xf32>,
    } else {
    }
    %c0 = arith.constant 0 : index
    %c0_1 = arith.constant 0 : index
    %3 = vector.load %arg2[%c0, %c0_1] : memref<8x128xf32, #tpu.memory_space<vmem>>, vector<8x128xf32>
    %c0_2 = arith.constant 0 : index
    %c0_3 = arith.constant 0 : index
    %4 = vector.load %arg8[%c0_2, %c0_3] : memref<8x128xf32, #tpu.memory_space<vmem>>, vector<8x128xf32>
    %c0_4 = arith.constant 0 : index
    %c0_5 = arith.constant 0 : index
    %5 = vector.load %arg5[%c0_4, %c0_5] : memref<128x128xf32, #tpu.memory_space<vmem>>, vector<128x128xf32>
    %cst = arith.constant dense<0.000000e+00> : vector<8x128xf32>
    %6 = tpu.matmul %4, %5, %cst {dimension_numbers = #tpu.dot_dimension_numbers<[1], [0], [0], [1], [0, 0, 1, 1], [], []>} : vector<8x128xf32>, vector<128x128xf32>, vector<8x128xf32> -> vector<8x128xf32>
    %c0_6 = arith.constant 0 : index
    %c0_7 = arith.constant 0 : index
    %7 = vector.load %arg6[%c0_6, %c0_7] : memref<1x128xf32, #tpu.memory_space<vmem>>, vector<1x128xf32>
    %8 = vector.broadcast %7 : vector<1x128xf32> to vector<8x128xf32>
    %9 = arith.addf %6, %8 : vector<8x128xf32>
    %10 = arith.addf %9, %3 : vector<8x128xf32>
    %c0_8 = arith.constant 0 : index
    %c0_9 = arith.constant 0 : index
    %11 = vector.load %arg7[%c0_8, %c0_9] : memref<8x128xf32, #tpu.memory_space<vmem>>, vector<8x128xf32>
    tpu.vector_store %arg7[%c0_8, %c0_9], %10 {strides = array<i32>} : memref<8x128xf32, #tpu.memory_space<vmem>>, vector<8x128xf32>,
    return
  }
  func.func @transform_0(%arg0: i32, %arg1: i32) -> (i32, i32) {
    %c0_i32 = arith.constant 0 : i32
    %c0_i32_0 = arith.constant 0 : i32
    return %arg0, %c0_i32 : i32, i32
  }
  func.func @transform_1(%arg0: i32, %arg1: i32) -> (i32, i32) {
    %c0_i32 = arith.constant 0 : i32
    %c0_i32_0 = arith.constant 0 : i32
    %c0_i32_1 = arith.constant 0 : i32
    return %c0_i32, %c0_i32_0 : i32, i32
  }
  func.func @transform_2(%arg0: i32, %arg1: i32) -> (i32, i32) {
    %c0_i32 = arith.constant 0 : i32
    %c0_i32_0 = arith.constant 0 : i32
    %c0_i32_1 = arith.constant 0 : i32
    return %c0_i32, %c0_i32_0 : i32, i32
  }
  func.func @transform_3(%arg0: i32, %arg1: i32) -> (i32, i32) {
    %c0_i32 = arith.constant 0 : i32
    %c0_i32_0 = arith.constant 0 : i32
    return %c0_i32, %arg1 : i32, i32
  }
  func.func @transform_4(%arg0: i32, %arg1: i32) -> (i32, i32) {
    %c0_i32 = arith.constant 0 : i32
    %c0_i32_0 = arith.constant 0 : i32
    return %c0_i32, %arg1 : i32, i32
  }
  func.func @transform_5(%arg0: i32, %arg1: i32) -> (i32, i32) {
    %c0_i32 = arith.constant 0 : i32
    return %arg0, %arg1 : i32, i32
  }
}

</mosaic_0001>

<llo_original>
// kernel: tpu_custom_call.1
$region0: #{tpu_custom_call.1}
  #allocation0 [shape = 'u32[]', space=smem, size = 0x4, offset = 0x4, fixed_abs, tag = 'smem constant byte address 0x4 - core index']
  #allocation1 [shape = 'u32[144,128]{1,0:T(1,128)}', space=vmem, size = 0x12000, scoped, tag = 'internal scratch']
  #allocation2 [shape = 'f32[8,128]{1,0:T(8,128)}', space=vmem, size = 0x1000, scoped, tag = 'scratch operand']
  %s0 = inlined_call_operand.hbm [shape: f32[8,128], index: 0, kind: input, shape index: {}]
  %s1 = inlined_call_operand.hbm [shape: f32[128,128], index: 1, kind: input, shape index: {}]
  %s2 = inlined_call_operand.vmem [shape: f32[1,128], index: 2, kind: input, shape index: {}]
  %s3 = inlined_call_operand.hbm [shape: f32[128,128], index: 3, kind: input, shape index: {}]
  %s4 = inlined_call_operand.vmem [shape: f32[1,128], index: 4, kind: input, shape index: {}]
  %s5 = inlined_call_operand.hbm [shape: f32[8,128], index: 5, kind: output, shape index: {}]
  %s6 = sld [smem:[#allocation0]]
  $region46: #{tpu_custom_call.1} parent=0
    _
  %s8 = ssub.s32 1, %s6
  %s9 = scalar_select 0, %s8, %s6
  $region1: #{tpu_custom_call.1} parent=0
    #allocation3 [shape = 'u8[4096]{0}', space=vmem, size = 0x1000, scoped, tag = 'input window, operand 0, single buffered']
    #allocation4 [shape = 's32[1]{0}', space=sflag, size = 0x4, scoped, tag = 'scoped memory for tpu_custom_call.1']
    #allocation5 [shape = 's32[1]{0}', space=sflag, size = 0x4, scoped, tag = 'scoped memory for tpu_custom_call.1']
    #allocation6 [shape = 'u8[65536]{0}', space=vmem, size = 0x10000, scoped, tag = 'input window, operand 1, single buffered']
    #allocation7 [shape = 's32[1]{0}', space=sflag, size = 0x4, scoped, tag = 'scoped memory for tpu_custom_call.1']
    #allocation8 [shape = 'u8[65536]{0}', space=vmem, size = 0x10000, scoped, tag = 'input window, operand 3, single buffered']
    #allocation9 [shape = 'u8[4096]{0}', space=vmem, size = 0x1000, scoped, tag = 'output window, operand 0, single buffered']
    %10 = vsyncpa [#allocation4], 0
    %11 = vsyncpa [#allocation7], 0
    %12 = vsyncpa [#allocation5], 0
    // Predicated region
    $region2: #{tpu_custom_call.1} parent=1 // pred_check
      _
    $region3: #{tpu_custom_call.1} parent=1 // pred_check_branch
      %14 = sbr.rel (0) target = $region5
    $region4: #{tpu_custom_call.1} parent=1 // pred_region
      %s16 = ssub.s32 128, 128
      %17 = vsyncadd [#allocation4], %s16
      %s19 = sshll.u32 [#allocation3], 4
      %s20 = int_to_ptr.vmem [resolvable:$true] %s19
      %22 = dma.hbm_to_vmem [thread:$0]  %s0, 128, %s20, [#allocation4]
    $region5: #{tpu_custom_call.1} parent=1 // pred_fallthru
      _
    // Predicated region
    $region6: #{tpu_custom_call.1} parent=1 // pred_check
      _
    $region7: #{tpu_custom_call.1} parent=1 // pred_check_branch
      %24 = sbr.rel (0) target = $region9
    $region8: #{tpu_custom_call.1} parent=1 // pred_region
      %s26 = ssub.s32 2048, 2048
      %27 = vsyncadd [#allocation7], %s26
      %s28 = sshll.u32 [#allocation6], 4
      %s29 = int_to_ptr.vmem [resolvable:$true] %s28
      %34 = dma.hbm_to_vmem [thread:$0]  %s1, 2048, %s29, [#allocation7], 128, 128, 8
    $region9: #{tpu_custom_call.1} parent=1 // pred_fallthru
      _
    // Predicated region
    $region10: #{tpu_custom_call.1} parent=1 // pred_check
      _
    $region11: #{tpu_custom_call.1} parent=1 // pred_check_branch
      %36 = sbr.rel (0) target = $region13
    $region12: #{tpu_custom_call.1} parent=1 // pred_region
      _
    $region13: #{tpu_custom_call.1} parent=1 // pred_fallthru
      _
    // Predicated region
    $region14: #{tpu_custom_call.1} parent=1 // pred_check
      _
    $region15: #{tpu_custom_call.1} parent=1 // pred_check_branch
      %38 = sbr.rel (0) target = $region17
    $region16: #{tpu_custom_call.1} parent=1 // pred_region
      %s40 = ssub.s32 2048, 2048
      %41 = vsyncadd [#allocation7], %s40
      %s42 = sshll.u32 [#allocation8], 4
      %s43 = int_to_ptr.vmem [resolvable:$true] %s42
      %48 = dma.hbm_to_vmem [thread:$0]  %s3, 2048, %s43, [#allocation7], 128, 128, 8
    $region17: #{tpu_custom_call.1} parent=1 // pred_fallthru
      _
    // Predicated region
    $region18: #{tpu_custom_call.1} parent=1 // pred_check
      _
    $region19: #{tpu_custom_call.1} parent=1 // pred_check_branch
      %50 = sbr.rel (0) target = $region21
    $region20: #{tpu_custom_call.1} parent=1 // pred_region
      _
    $region21: #{tpu_custom_call.1} parent=1 // pred_fallthru
      _
    // Predicated region
    $region22: #{tpu_custom_call.1} parent=1 // pred_check
      _
    $region23: #{tpu_custom_call.1} parent=1 // pred_check_branch
      %52 = sbr.rel (0) target = $region25
    $region24: #{tpu_custom_call.1} parent=1 // pred_region
      %53 = dma.done [#allocation4], 128
    $region25: #{tpu_custom_call.1} parent=1 // pred_fallthru
      _
    // Predicated region
    $region26: #{tpu_custom_call.1} parent=1 // pred_check
      _
    $region27: #{tpu_custom_call.1} parent=1 // pred_check_branch
      %55 = sbr.rel (0) target = $region29
    $region28: #{tpu_custom_call.1} parent=1 // pred_region
      %56 = dma.done [#allocation7], 2048
    $region29: #{tpu_custom_call.1} parent=1 // pred_fallthru
      _
    // Predicated region
    $region30: #{tpu_custom_call.1} parent=1 // pred_check
      _
    $region31: #{tpu_custom_call.1} parent=1 // pred_check_branch
      %58 = sbr.rel (0) target = $region33
    $region32: #{tpu_custom_call.1} parent=1 // pred_region
      %59 = dma.done [#allocation7], 2048
    $region33: #{tpu_custom_call.1} parent=1 // pred_fallthru
      _
    %p60 = scmp.eq.s32.totalorder 0, 0
    // Predicated region
    $region34: #{tpu_custom_call.1} parent=1 // pred_check
      %p61 = pneg %p60
    $region35: #{tpu_custom_call.1} parent=1 // pred_check_branch
      %63 = sbr.rel (%p61) target = $region37
    $region36: #{tpu_custom_call.1} parent=1 // pred_region
      %v64 = vld [vmem:[#allocation3] sm:$0xff]
      %v65 = vld [vmem:[#allocation6] sm:$0xff]
      %v66 = vld [vmem:[#allocation6 + $0x8] sm:$0xff]
      %v67 = vld [vmem:[#allocation6 + $0x10] sm:$0xff]
      %v68 = vld [vmem:[#allocation6 + $0x18] sm:$0xff]
      %v69 = vld [vmem:[#allocation6 + $0x20] sm:$0xff]
      %v70 = vld [vmem:[#allocation6 + $0x28] sm:$0xff]
      %v71 = vld [vmem:[#allocation6 + $0x30] sm:$0xff]
      %v72 = vld [vmem:[#allocation6 + $0x38] sm:$0xff]
      %v73 = vld [vmem:[#allocation6 + $0x40] sm:$0xff]
      %v74 = vld [vmem:[#allocation6 + $0x48] sm:$0xff]
      %v75 = vld [vmem:[#allocation6 + $0x50] sm:$0xff]
      %v76 = vld [vmem:[#allocation6 + $0x58] sm:$0xff]
      %v77 = vld [vmem:[#allocation6 + $0x60] sm:$0xff]
      %v78 = vld [vmem:[#allocation6 + $0x68] sm:$0xff]
      %v79 = vld [vmem:[#allocation6 + $0x70] sm:$0xff]
      %v80 = vld [vmem:[#allocation6 + $0x78] sm:$0xff]
      %v81 = vld [vmem:[%s2] sm:$0x1]
      %v83 = vlaneseq
      %v84 = vshrl.u32 %v83, 7
      %v85 = vsub.s32 0, %v84
      %v86 = vrot.slane %v81, %v85
      %88 = vmatprep.subr.mxu0 0.0
      %89 = vmatpush1.msra.mxu0 %v65
      %90 = vmatprep.subr.mxu0 0.0
      %91 = vmatpush1.msra.mxu0 %v66
      %92 = vmatprep.subr.mxu0 0.0
      %93 = vmatpush1.msra.mxu0 %v67
      %94 = vmatprep.subr.mxu0 0.0
      %95 = vmatpush1.msra.mxu0 %v68
      %96 = vmatprep.subr.mxu0 0.0
      %97 = vmatpush1.msra.mxu0 %v69
      %98 = vmatprep.subr.mxu0 0.0
      %99 = vmatpush1.msra.mxu0 %v70
      %100 = vmatprep.subr.mxu0 0.0
      %101 = vmatpush1.msra.mxu0 %v71
      %102 = vmatprep.subr.mxu0 0.0
      %103 = vmatpush1.msra.mxu0 %v72
      %104 = vmatprep.subr.mxu0 0.0
      %105 = vmatpush1.msra.mxu0 %v73
      %106 = vmatprep.subr.mxu0 0.0
      %107 = vmatpush1.msra.mxu0 %v74
      %108 = vmatprep.subr.mxu0 0.0
      %109 = vmatpush1.msra.mxu0 %v75
      %110 = vmatprep.subr.mxu0 0.0
      %111 = vmatpush1.msra.mxu0 %v76
      %112 = vmatprep.subr.mxu0 0.0
      %113 = vmatpush1.msra.mxu0 %v77
      %114 = vmatprep.subr.mxu0 0.0
      %115 = vmatpush1.msra.mxu0 %v78
      %116 = vmatprep.subr.mxu0 0.0
      %117 = vmatpush1.msra.mxu0 %v79
      %118 = vmatprep.subr.mxu0 0.0
      %119 = vmatpush1.msra.mxu0 %v80
      %120 = vmatprep.subr.mxu0 0.0
      %121 = vmatpush1.msra.mxu0 0.0
      %122 = vmatprep.subr.mxu0 0.0
      %123 = vmatpush1.msra.mxu0 0.0
      %124 = vmatprep.subr.mxu0 0.0
      %125 = vmatpush1.msra.mxu0 0.0
      %126 = vmatprep.subr.mxu0 0.0
      %127 = vmatpush1.msra.mxu0 0.0
      %128 = vmatprep.subr.mxu0 0.0
      %129 = vmatpush1.msra.mxu0 0.0
      %130 = vmatprep.subr.mxu0 0.0
      %131 = vmatpush1.msra.mxu0 0.0
      %132 = vmatprep.subr.mxu0 0.0
      %133 = vmatpush1.msra.mxu0 0.0
      %134 = vmatprep.subr.mxu0 0.0
      %135 = vmatpush1.msra.mxu0 0.0
      %136 = vmatprep.subr.mxu0 0.0
      %137 = vmatpush1.msra.mxu0 0.0
      %138 = vmatprep.subr.mxu0 0.0
      %139 = vmatpush1.msra.mxu0 0.0
      %140 = vmatprep.subr.mxu0 0.0
      %141 = vmatpush1.msra.mxu0 0.0
      %142 = vmatprep.subr.mxu0 0.0
      %143 = vmatpush1.msra.mxu0 0.0
      %144 = vmatprep.subr.mxu0 0.0
      %145 = vmatpush1.msra.mxu0 0.0
      %146 = vmatprep.subr.mxu0 0.0
      %147 = vmatpush1.msra.mxu0 0.0
      %148 = vmatprep.subr.mxu0 0.0
      %149 = vmatpush1.msra.mxu0 0.0
      %150 = vmatprep.subr.mxu0 0.0
      %151 = vmatpush1.msra.mxu0 0.0
      %152 = vmatprep.mubr.f32.mxu0 0.0
      %153 = vmatmul.mubr.f32.gmra.mrb[0].mxu0 %v64
      %v154 = vpop.f32.mrb[0].mxu0
      %v155 = vadd.f32 %v86, %v154
      %v156 = vpop.f32.mrb[0].mxu0
      %157 = vdwg.mxu0
      %v158 = vmax.f32 %v155, 0.0
      %159 = vst [vmem:[#allocation2] sm:$0xff] %v158
    $region37: #{tpu_custom_call.1} parent=1 // pred_fallthru
      _
    %v160 = vld [vmem:[#allocation3] sm:$0xff]
    %v161 = vld [vmem:[#allocation2] sm:$0xff]
    %v162 = vld [vmem:[#allocation8] sm:$0xff]
    %v163 = vld [vmem:[#allocation8 + $0x8] sm:$0xff]
    %v164 = vld [vmem:[#allocation8 + $0x10] sm:$0xff]
    %v165 = vld [vmem:[#allocation8 + $0x18] sm:$0xff]
    %v166 = vld [vmem:[#allocation8 + $0x20] sm:$0xff]
    %v167 = vld [vmem:[#allocation8 + $0x28] sm:$0xff]
    %v168 = vld [vmem:[#allocation8 + $0x30] sm:$0xff]
    %v169 = vld [vmem:[#allocation8 + $0x38] sm:$0xff]
    %v170 = vld [vmem:[#allocation8 + $0x40] sm:$0xff]
    %v171 = vld [vmem:[#allocation8 + $0x48] sm:$0xff]
    %v172 = vld [vmem:[#allocation8 + $0x50] sm:$0xff]
    %v173 = vld [vmem:[#allocation8 + $0x58] sm:$0xff]
    %v174 = vld [vmem:[#allocation8 + $0x60] sm:$0xff]
    %v175 = vld [vmem:[#allocation8 + $0x68] sm:$0xff]
    %v176 = vld [vmem:[#allocation8 + $0x70] sm:$0xff]
    %v177 = vld [vmem:[#allocation8 + $0x78] sm:$0xff]
    %v178 = vld [vmem:[%s4] sm:$0x1]
    %v180 = vlaneseq
    %v181 = vshrl.u32 %v180, 7
    %v182 = vsub.s32 0, %v181
    %v183 = vrot.slane %v178, %v182
    %185 = vmatprep.subr.mxu0 0.0
    %186 = vmatpush1.msra.mxu0 %v162
    %187 = vmatprep.subr.mxu0 0.0
    %188 = vmatpush1.msra.mxu0 %v163
    %189 = vmatprep.subr.mxu0 0.0
    %190 = vmatpush1.msra.mxu0 %v164
    %191 = vmatprep.subr.mxu0 0.0
    %192 = vmatpush1.msra.mxu0 %v165
    %193 = vmatprep.subr.mxu0 0.0
    %194 = vmatpush1.msra.mxu0 %v166
    %195 = vmatprep.subr.mxu0 0.0
    %196 = vmatpush1.msra.mxu0 %v167
    %197 = vmatprep.subr.mxu0 0.0
    %198 = vmatpush1.msra.mxu0 %v168
    %199 = vmatprep.subr.mxu0 0.0
    %200 = vmatpush1.msra.mxu0 %v169
    %201 = vmatprep.subr.mxu0 0.0
    %202 = vmatpush1.msra.mxu0 %v170
    %203 = vmatprep.subr.mxu0 0.0
    %204 = vmatpush1.msra.mxu0 %v171
    %205 = vmatprep.subr.mxu0 0.0
    %206 = vmatpush1.msra.mxu0 %v172
    %207 = vmatprep.subr.mxu0 0.0
    %208 = vmatpush1.msra.mxu0 %v173
    %209 = vmatprep.subr.mxu0 0.0
    %210 = vmatpush1.msra.mxu0 %v174
    %211 = vmatprep.subr.mxu0 0.0
    %212 = vmatpush1.msra.mxu0 %v175
    %213 = vmatprep.subr.mxu0 0.0
    %214 = vmatpush1.msra.mxu0 %v176
    %215 = vmatprep.subr.mxu0 0.0
    %216 = vmatpush1.msra.mxu0 %v177
    %217 = vmatprep.subr.mxu0 0.0
    %218 = vmatpush1.msra.mxu0 0.0
    %219 = vmatprep.subr.mxu0 0.0
    %220 = vmatpush1.msra.mxu0 0.0
    %221 = vmatprep.subr.mxu0 0.0
    %222 = vmatpush1.msra.mxu0 0.0
    %223 = vmatprep.subr.mxu0 0.0
    %224 = vmatpush1.msra.mxu0 0.0
    %225 = vmatprep.subr.mxu0 0.0
    %226 = vmatpush1.msra.mxu0 0.0
    %227 = vmatprep.subr.mxu0 0.0
    %228 = vmatpush1.msra.mxu0 0.0
    %229 = vmatprep.subr.mxu0 0.0
    %230 = vmatpush1.msra.mxu0 0.0
    %231 = vmatprep.subr.mxu0 0.0
    %232 = vmatpush1.msra.mxu0 0.0
    %233 = vmatprep.subr.mxu0 0.0
    %234 = vmatpush1.msra.mxu0 0.0
    %235 = vmatprep.subr.mxu0 0.0
    %236 = vmatpush1.msra.mxu0 0.0
    %237 = vmatprep.subr.mxu0 0.0
    %238 = vmatpush1.msra.mxu0 0.0
    %239 = vmatprep.subr.mxu0 0.0
    %240 = vmatpush1.msra.mxu0 0.0
    %241 = vmatprep.subr.mxu0 0.0
    %242 = vmatpush1.msra.mxu0 0.0
    %243 = vmatprep.subr.mxu0 0.0
    %244 = vmatpush1.msra.mxu0 0.0
    %245 = vmatprep.subr.mxu0 0.0
    %246 = vmatpush1.msra.mxu0 0.0
    %247 = vmatprep.subr.mxu0 0.0
    %248 = vmatpush1.msra.mxu0 0.0
    %249 = vmatprep.mubr.f32.mxu0 0.0
    %250 = vmatmul.mubr.f32.gmra.mrb[0].mxu0 %v161
    %v251 = vpop.f32.mrb[0].mxu0
    %v252 = vadd.f32 %v183, %v251
    %v253 = vpop.f32.mrb[0].mxu0
    %254 = vdwg.mxu0
    %v255 = vadd.f32 %v252, %v160
    %256 = vst [vmem:[#allocation9] sm:$0xff] %v255
    // Predicated region
    $region38: #{tpu_custom_call.1} parent=1 // pred_check
      _
    $region39: #{tpu_custom_call.1} parent=1 // pred_check_branch
      %258 = sbr.rel (0) target = $region41
    $region40: #{tpu_custom_call.1} parent=1 // pred_region
      %s260 = ssub.s32 128, 128
      %261 = vsyncadd [#allocation5], %s260
      %s263 = sshll.u32 [#allocation9], 4
      %s264 = int_to_ptr.vmem [resolvable:$true] %s263
      %266 = dma.vmem_to_hbm [thread:$0]  %s264, 128, %s5, [#allocation5]
    $region41: #{tpu_custom_call.1} parent=1 // pred_fallthru
      _
    // Predicated region
    $region42: #{tpu_custom_call.1} parent=1 // pred_check
      _
    $region43: #{tpu_custom_call.1} parent=1 // pred_check_branch
      %268 = sbr.rel (0) target = $region45
    $region44: #{tpu_custom_call.1} parent=1 // pred_region
      %269 = dma.done [#allocation5], 128
    $region45: #{tpu_custom_call.1} parent=1 // pred_fallthru
      _
    %270 = vsyncpa [#allocation4], 1
    %271 = vsyncpa [#allocation7], 1
    %272 = vsyncpa [#allocation5], 1

</llo_original>
